<compile_context>
chip_gen: v7x
topology: tpu7x:2x2x1
jax: 0.10.0
libtpu: 0.0.40
codegen_flags: <defaults>
</compile_context>

<pallas_src>
import functools

import jax
import jax.numpy as jnp
from jax.experimental import pallas as pl
from jax.experimental.pallas import tpu as pltpu


# ----------------------------------------------------------------------------
# Kernels
# ----------------------------------------------------------------------------
def _shuffle_kernel_strided(x_ref, o_ref, *, groups: int):
    """Channel shuffle via strided sublane-slice copies (no VMEM temporaries).

    x_ref / o_ref: (nb, C, HW) VMEM tiles.  Output channel o = j*groups + i
    reads input channel i*cpg + j (i = o % groups, j = o // groups,
    cpg = C // groups) -- the classic reshape(groups, cpg) -> transpose ->
    reshape(C) permutation, expressed as a small unrolled set of strided
    copies so Mosaic does not materialize a block-sized relayout temporary.
    """
    _, C, _ = x_ref.shape
    cpg = C // groups
    if groups <= cpg:
        # `groups` copies: contiguous input rows -> stride-`groups` output rows.
        for i in range(groups):
            o_ref[:, pl.ds(i, cpg, stride=groups), :] = (
                x_ref[:, pl.ds(i * cpg, cpg), :])
    else:
        # Fewer iterations this way: stride-`cpg` input rows -> contiguous rows.
        for j in range(cpg):
            o_ref[:, pl.ds(j * groups, groups), :] = (
                x_ref[:, pl.ds(j, groups, stride=cpg), :])


def _shuffle_kernel_swapaxes(x_ref, o_ref, *, groups: int):
    """Fallback: single full-tile load -> in-vreg permute -> single store."""
    nb, C, hw = x_ref.shape
    cpg = C // groups
    x = x_ref[...].reshape(nb, groups, cpg, hw)
    o_ref[...] = jnp.swapaxes(x, 1, 2).reshape(nb, C, hw)


# ----------------------------------------------------------------------------
# Wrapper
# ----------------------------------------------------------------------------
def _tensorcores_per_device() -> int:
    """Best-effort TensorCores-per-device (v7x / megacore = 2, v5e/v6e = 1)."""
    try:
        kind = jax.devices()[0].device_kind.lower()
    except Exception:
        return 1
    if "lite" in kind or "v5e" in kind or "v6e" in kind:
        return 1
    return 2


_STRIDED_COPY_OK = [True]  # flipped to False if strided sublane slices reject


def channel_shuffle_pallas(x: jax.Array, groups: int) -> jax.Array:
    """x: (N, C, H, W) -> channel-shuffled (N, C, H, W) via a Pallas TPU kernel."""
    N, C, H, W = x.shape
    assert C % groups == 0, "channels must be divisible by groups"
    HW = H * W
    dtype = x.dtype
    itemsize = jnp.dtype(dtype).itemsize

    # Free contiguous reshape; no padding / slicing: the bandwidth-bound kernel
    # reads and writes exactly N*C*HW*itemsize bytes each way.
    x2 = x.reshape(N, C, HW)

    plane_bytes = C * HW * itemsize
    target_bytes = 4 << 20          # ~4 MiB blocks: HBM-roofline plateau
    tc = _tensorcores_per_device()

    if plane_bytes > target_bytes and HW >= 256:
        # Large spatial planes: one batch element per block, tile the lane (HW)
        # dim in multiples of 128 so stores stay lane-dense and VMEM is bounded.
        nb = 1
        hw_tile = max(128, (target_bytes // (C * itemsize)) // 128 * 128)
        hw_tile = min(hw_tile, (HW // 128) * 128)
    else:
        hw_tile = HW                # full lane extent (legal even if HW % 128 != 0)
        nb = max(1, min(N, target_bytes // max(plane_bytes, 1)))
        if tc > 1 and N >= 2:
            # Multi-TC chip: keep >= 2 batch steps so both cores get work.
            # On single-TC v5e/v6e the largest block wins (no cap).
            nb = min(nb, (N + 1) // 2)

    grid = (pl.cdiv(N, nb), pl.cdiv(HW, hw_tile))
    block = (nb, C, hw_tile)
    block_bytes = nb * C * hw_tile * itemsize
    # Double-buffered in + out (4x block) plus relayout temporaries of the
    # fallback kernel (~2x block) plus margin; floored below every generation's
    # default scoped limit, capped below v7x's 64 MiB physical VMEM.
    vmem_limit = int(min(max(8 * block_bytes + (2 << 20), 16 << 20), 48 << 20))

    def run(kernel_fn):
        return pl.pallas_call(
            functools.partial(kernel_fn, groups=groups),
            out_shape=jax.ShapeDtypeStruct((N, C, HW), dtype),
            grid_spec=pltpu.PrefetchScalarGridSpec(
                num_scalar_prefetch=0,
                grid=grid,
                in_specs=[pl.BlockSpec(block, lambda n, h: (n, 0, h))],
                out_specs=pl.BlockSpec(block, lambda n, h: (n, 0, h)),
            ),
            compiler_params=pltpu.CompilerParams(
                dimension_semantics=("parallel", "parallel"),
                vmem_limit_bytes=vmem_limit,
            ),
            cost_estimate=pl.CostEstimate(
                flops=0,
                transcendentals=0,
                bytes_accessed=2 * N * C * HW * itemsize,
            ),
        )(x2)

    if _STRIDED_COPY_OK[0]:
        try:
            out = jax.block_until_ready(run(_shuffle_kernel_strided))
        except Exception:
            # Strided sublane stores rejected by lowering for this shape/dtype;
            # fall back to the single-load/permute/single-store kernel.
            _STRIDED_COPY_OK[0] = False
            out = run(_shuffle_kernel_swapaxes)
    else:
        out = run(_shuffle_kernel_swapaxes)

    return out.reshape(N, C, H, W)


# ----------------------------------------------------------------------------
# Reference + module forward semantics
# ----------------------------------------------------------------------------
def channel_shuffle_ref(x: jax.Array, groups: int) -> jax.Array:
    """Pure-JAX reference of torch-style channel shuffle."""
    N, C, H, W = x.shape
    cpg = C // groups
    return (
        x.reshape(N, groups, cpg, H, W)
        .transpose(0, 2, 1, 3, 4)
        .reshape(N, C, H, W)
    )


def shufflenet_model_forward(x: jax.Array):
    """Exact semantics of ShuffleNetModel.forward: the body is empty -> None."""
    return None


if __name__ == "__main__":
    key = jax.random.PRNGKey(0)

    # Small NCHW input consistent with a conv-style module:
    # batch=2, channels=4, spatial=16x16 (HW = 256, lane-aligned).
    x = jax.random.normal(key, (2, 4, 16, 16), dtype=jnp.float32)
    y = channel_shuffle_pallas(x, groups=2)
    jax.block_until_ready(y)
    # Pure permutation -> require exact bitwise equality.
    assert jnp.array_equal(y, channel_shuffle_ref(x, 2)), "channel shuffle mismatch"

    # Non-lane-aligned spatial size (7x7 -> HW=49) and a narrow dtype:
    # exercises the unpadded full-extent lane block and packed sublanes.
    x2 = jax.random.normal(jax.random.PRNGKey(0), (2, 8, 7, 7), dtype=jnp.bfloat16)
    y2 = channel_shuffle_pallas(x2, groups=4)
    jax.block_until_ready(y2)
    assert jnp.array_equal(y2, channel_shuffle_ref(x2, 4)), "bf16 / HW=49 mismatch"

    # Exact reference-module semantics: forward() body is empty -> returns None.
    assert shufflenet_model_forward(x) is None

    print("KERNEL_OK")
</pallas_src>

<mosaic_0001>
module attributes {stable_mosaic.version = 11 : i64} {
  func.func @_shuffle_kernel_strided(%arg0: i32, %arg1: i32, %arg2: memref<1x4x256xf32, #tpu.memory_space<vmem>>, %arg3: memref<1x4x256xf32, #tpu.memory_space<vmem>>) attributes {dimension_semantics = [#tpu.dimension_semantics<parallel>, #tpu.dimension_semantics<parallel>], iteration_bounds = array<i64: 2, 1>, scalar_prefetch = 0 : i64, scratch_operands = 0 : i64, tpu.core_type = #tpu.core_type<tc>, window_params = [{transform_indices = @transform_0, window_bounds = array<i64: 1, 4, 256>}, {transform_indices = @transform_1, window_bounds = array<i64: 1, 4, 256>}]} {
    %c0 = arith.constant 0 : index
    %c0_0 = arith.constant 0 : index
    %c0_1 = arith.constant 0 : index
    %0 = vector.load %arg2[%c0, %c0_0, %c0_1] : memref<1x4x256xf32, #tpu.memory_space<vmem>>, vector<1x2x256xf32>
    %c0_2 = arith.constant 0 : index
    %c0_3 = arith.constant 0 : index
    %c0_4 = arith.constant 0 : index
    %1 = tpu.strided_load %arg3[%c0_2, %c0_3, %c0_4] {strides = array<i32: 1, 2, 1>} : memref<1x4x256xf32, #tpu.memory_space<vmem>>, vector<1x2x256xf32>
    tpu.strided_store %arg3[%c0_2, %c0_3, %c0_4], %0 {strides = array<i32: 1, 2, 1>} : memref<1x4x256xf32, #tpu.memory_space<vmem>>, vector<1x2x256xf32>
    %c0_5 = arith.constant 0 : index
    %c2 = arith.constant 2 : index
    %c0_6 = arith.constant 0 : index
    %2 = vector.load %arg2[%c0_5, %c2, %c0_6] : memref<1x4x256xf32, #tpu.memory_space<vmem>>, vector<1x2x256xf32>
    %c0_7 = arith.constant 0 : index
    %c1 = arith.constant 1 : index
    %c0_8 = arith.constant 0 : index
    %3 = tpu.strided_load %arg3[%c0_7, %c1, %c0_8] {strides = array<i32: 1, 2, 1>} : memref<1x4x256xf32, #tpu.memory_space<vmem>>, vector<1x2x256xf32>
    tpu.strided_store %arg3[%c0_7, %c1, %c0_8], %2 {strides = array<i32: 1, 2, 1>} : memref<1x4x256xf32, #tpu.memory_space<vmem>>, vector<1x2x256xf32>
    return
  }
  func.func @transform_0(%arg0: i32, %arg1: i32) -> (i32, i32, i32) {
    %c0_i32 = arith.constant 0 : i32
    %c0_i32_0 = arith.constant 0 : i32
    return %arg0, %c0_i32, %arg1 : i32, i32, i32
  }
  func.func @transform_1(%arg0: i32, %arg1: i32) -> (i32, i32, i32) {
    %c0_i32 = arith.constant 0 : i32
    %c0_i32_0 = arith.constant 0 : i32
    return %arg0, %c0_i32, %arg1 : i32, i32, i32
  }
}

module attributes {stable_mosaic.version = 11 : i64} {
  func.func @_shuffle_kernel_swapaxes(%arg0: i32, %arg1: i32, %arg2: memref<1x4x256xf32, #tpu.memory_space<vmem>>, %arg3: memref<1x4x256xf32, #tpu.memory_space<vmem>>) attributes {dimension_semantics = [#tpu.dimension_semantics<parallel>, #tpu.dimension_semantics<parallel>], iteration_bounds = array<i64: 2, 1>, scalar_prefetch = 0 : i64, scratch_operands = 0 : i64, tpu.core_type = #tpu.core_type<tc>, window_params = [{transform_indices = @transform_0, window_bounds = array<i64: 1, 4, 256>}, {transform_indices = @transform_1, window_bounds = array<i64: 1, 4, 256>}]} {
    %c0 = arith.constant 0 : index
    %c0_0 = arith.constant 0 : index
    %c0_1 = arith.constant 0 : index
    %0 = vector.load %arg2[%c0, %c0_0, %c0_1] : memref<1x4x256xf32, #tpu.memory_space<vmem>>, vector<1x4x256xf32>
    %1 = vector.shape_cast %0 : vector<1x4x256xf32> to vector<1x2x2x256xf32>
    %2 = tpu.transpose %1, [0, 2, 1, 3] : vector<1x2x2x256xf32> -> vector<1x2x2x256xf32>
    %3 = vector.shape_cast %2 : vector<1x2x2x256xf32> to vector<1x4x256xf32>
    %c0_2 = arith.constant 0 : index
    %c0_3 = arith.constant 0 : index
    %c0_4 = arith.constant 0 : index
    %4 = vector.load %arg3[%c0_2, %c0_3, %c0_4] : memref<1x4x256xf32, #tpu.memory_space<vmem>>, vector<1x4x256xf32>
    tpu.vector_store %arg3[%c0_2, %c0_3, %c0_4], %3 {strides = array<i32>} : memref<1x4x256xf32, #tpu.memory_space<vmem>>, vector<1x4x256xf32>,
    return
  }
  func.func @transform_0(%arg0: i32, %arg1: i32) -> (i32, i32, i32) {
    %c0_i32 = arith.constant 0 : i32
    %c0_i32_0 = arith.constant 0 : i32
    return %arg0, %c0_i32, %arg1 : i32, i32, i32
  }
  func.func @transform_1(%arg0: i32, %arg1: i32) -> (i32, i32, i32) {
    %c0_i32 = arith.constant 0 : i32
    %c0_i32_0 = arith.constant 0 : i32
    return %arg0, %c0_i32, %arg1 : i32, i32, i32
  }
}

</mosaic_0001>

<llo_original>
// kernel: tpu_custom_call.1
$region0: #{tpu_custom_call.1}
  #allocation0 [shape = 'u32[]', space=smem, size = 0x4, offset = 0x4, fixed_abs, tag = 'smem constant byte address 0x4 - core index']
  #allocation1 [shape = 'u32[144,128]{1,0:T(1,128)}', space=vmem, size = 0x12000, scoped, tag = 'internal scratch']
  %s0 = inlined_call_operand.hbm [shape: f32[2,4,256], index: 0, kind: input, shape index: {}]
  %s1 = inlined_call_operand.hbm [shape: f32[2,4,256], index: 1, kind: output, shape index: {}]
  %s2 = sld [smem:[#allocation0]]
  $region41: #{tpu_custom_call.1} parent=0
    _
  %s4 = ssub.s32 1, %s2
  %s5 = scalar_select 0, %s4, %s2
  $region1: #{tpu_custom_call.1} parent=0
    #allocation2 [shape = 'u8[8192]{0}', space=vmem, size = 0x2000, scoped, tag = 'input window, operand 0']
    #allocation3 [shape = 's32[2]{0}', space=sflag, size = 0x8, scoped, tag = 'scoped memory for tpu_custom_call.1']
    #allocation4 [shape = 's32[2]{0}', space=sflag, size = 0x8, scoped, tag = 'scoped memory for tpu_custom_call.1']
    #allocation5 [shape = 'u8[8192]{0}', space=vmem, size = 0x2000, scoped, tag = 'output window, operand 0']
    %6 = vsyncpa [#allocation3], 0
    %s7 = scalar_lea.sflag [#allocation3], 1
    %8 = vsyncpa %s7, 0
    %9 = vsyncpa [#allocation4], 0
    %s10 = scalar_lea.sflag [#allocation4], 1
    %11 = vsyncpa %s10, 0
    loop: start=0, step=1, limit=4
    $region2: #{tpu_custom_call.1} parent=1 // loop_pre_header
      _
    $region3: #{tpu_custom_call.1} parent=1 // loop_header
      %s13 = sphi 0, %s17
      %p14 = scmp.ge.s32.totalorder %s13, 4
      %s20 = sphi 0, %s32
      %s21 = sphi 0, %s28
      %s22 = sphi 0, %s20
      %s23 = sphi 0, %s21
      %s24 = sphi 0, %s22
      %s25 = sphi 0, %s23
      %s37 = sphi 0, %s39
      %s40 = sphi 0, %s37
      %s41 = sphi 0, %s40
      %s57 = sphi 0, %s41
      %s65 = sphi 0, %s67
      %s68 = sphi 0, %s65
      %s69 = sphi 0, %s68
      %s85 = sphi 0, %s69
    $region4: #{tpu_custom_call.1} parent=1 // loop_header_branch
      %16 = sbr.rel (%p14) target = $region8
    $region5: #{tpu_custom_call.1} parent=1 // loop_body
      %s18 = ssub.s32 %s13, 1
      %s19 = ssub.s32 %s13, 2
      %s26 = sadd.s32 1, %s21
      %p27 = scmp.ge.s32.totalorder %s26, 1
      %s28 = scalar_select %p27, 0, %s26
      %s29 = sadd.s32 1, %s20
      %s30 = scalar_select %p27, %s29, %s20
      %p31 = scmp.ge.s32.totalorder %s30, 2
      %s32 = scalar_select %p31, 0, %s30
      %s33 = ssub.s32 %s20, %s32
      %s34 = ssub.s32 %s21, %s28
      %s35 = sor.u32 %s33, %s34
      %p36 = scmp.eq.s32.totalorder %s35, 0
      %s38 = sadd.s32 %s37, 1
      %s39 = scalar_select %p36, %s37, %s38
      %p42 = pneg %p36
      %p43 = scmp.eq.s32.totalorder %s13, 1
      %p44 = por %p42, %p43
      %p45 = scmp.ne.s32.totalorder %s37, %s40
      %p46 = scmp.eq.s32.totalorder %s13, 0
      %p47 = por %p45, %p46
      %p48 = scmp.ne.s32.totalorder %s37, %s40
      %p49 = scmp.eq.s32.totalorder %s18, 1
      %p50 = por %p48, %p49
      %p51 = scmp.ne.s32.totalorder %s40, %s41
      %p52 = scmp.eq.s32.totalorder %s18, 0
      %p53 = por %p51, %p52
      %p54 = scmp.ne.s32.totalorder %s40, %s41
      %p55 = scmp.eq.s32.totalorder %s19, 1
      %p56 = por %p54, %p55
      %p58 = scmp.ne.s32.totalorder %s41, %s57
      %p59 = scmp.eq.s32.totalorder %s19, 0
      %p60 = por %p58, %p59
      %s61 = ssub.s32 %s20, %s32
      %s62 = ssub.s32 %s21, %s28
      %s63 = sor.u32 %s61, %s62
      %p64 = scmp.eq.s32.totalorder %s63, 0
      %s66 = sadd.s32 %s65, 1
      %s67 = scalar_select %p64, %s65, %s66
      %p70 = pneg %p64
      %p71 = scmp.eq.s32.totalorder %s13, 1
      %p72 = por %p70, %p71
      %p73 = scmp.ne.s32.totalorder %s65, %s68
      %p74 = scmp.eq.s32.totalorder %s13, 0
      %p75 = por %p73, %p74
      %p76 = scmp.ne.s32.totalorder %s65, %s68
      %p77 = scmp.eq.s32.totalorder %s18, 1
      %p78 = por %p76, %p77
      %p79 = scmp.ne.s32.totalorder %s68, %s69
      %p80 = scmp.eq.s32.totalorder %s18, 0
      %p81 = por %p79, %p80
      %p82 = scmp.ne.s32.totalorder %s68, %s69
      %p83 = scmp.eq.s32.totalorder %s19, 1
      %p84 = por %p82, %p83
      %p86 = scmp.ne.s32.totalorder %s69, %s85
      %p87 = scmp.eq.s32.totalorder %s19, 0
      %p88 = por %p86, %p87
      %p89 = scmp.le.s32.totalorder 1, %s13
      %p90 = scmp.lt.s32.totalorder %s13, 3
      %p91 = pnand %p89, %p90
      %p92 = pneg %p91
      // Predicated region
      $region9: #{tpu_custom_call.1} parent=5 // pred_check
        _
      $region10: #{tpu_custom_call.1} parent=5 // pred_check_branch
        %94 = sbr.rel (%p91) target = $region12
      $region11: #{tpu_custom_call.1} parent=5 // pred_region
        %s95 = ssub.s32 %s13, 1
      $region12: #{tpu_custom_call.1} parent=5 // pred_fallthru
        _
      %p96 = scmp.lt.s32.totalorder %s13, 2
      // Predicated region
      $region13: #{tpu_custom_call.1} parent=5 // pred_check
        %p97 = pneg %p96
      $region14: #{tpu_custom_call.1} parent=5 // pred_check_branch
        %99 = sbr.rel (%p97) target = $region16
      $region15: #{tpu_custom_call.1} parent=5 // pred_region
        // Predicated region
        $region17: #{tpu_custom_call.1} parent=15 // pred_check
          %p100 = pneg %p47
        $region18: #{tpu_custom_call.1} parent=15 // pred_check_branch
          %102 = sbr.rel (%p100) target = $region20
        $region19: #{tpu_custom_call.1} parent=15 // pred_region
          %s103 = sand.u32 %s37, 1
          %s104 = scalar_lea.sflag [#allocation3], %s103
          %s105 = sand.u32 %s37, 1
          %s106 = smul.addr %s105, 8
          %s107 = scalar_lea.vmem [#allocation2], %s106
          %s108 = smul.u32 2, %s21
          %s110 = ssub.s32 128, 128
          %111 = vsyncadd %s104, %s110
          %s112 = smul.addr %s20, 2
          %s113 = sadd.s32 %s108, %s112
          %s114 = smul.addr %s113, 64
          %s115 = scalar_lea.hbm %s0, %s114
          %s117 = sshll.u32 %s107, 4
          %s118 = int_to_ptr.vmem [resolvable:$true] %s117
          %120 = dma.hbm_to_vmem [thread:$0]  %s115, 128, %s118, %s104
        $region20: #{tpu_custom_call.1} parent=15 // pred_fallthru
          _
      $region16: #{tpu_custom_call.1} parent=5 // pred_fallthru
        _
      %p121 = scmp.le.s32.totalorder 1, %s13
      %p122 = scmp.lt.s32.totalorder %s13, 3
      %p123 = pnand %p121, %p122
      %p124 = pneg %p123
      // Predicated region
      $region21: #{tpu_custom_call.1} parent=5 // pred_check
        _
      $region22: #{tpu_custom_call.1} parent=5 // pred_check_branch
        %126 = sbr.rel (%p123) target = $region24
      $region23: #{tpu_custom_call.1} parent=5 // pred_region
        %s127 = ssub.s32 %s13, 1
        %s128 = sand.u32 %s40, 1
        %s129 = scalar_lea.sflag [#allocation3], %s128
        %s130 = sand.u32 %s40, 1
        %s131 = smul.addr %s130, 8
        %s132 = scalar_lea.vmem [#allocation2], %s131
        // Predicated region
        $region25: #{tpu_custom_call.1} parent=23 // pred_check
          %p133 = pneg %p53
        $region26: #{tpu_custom_call.1} parent=23 // pred_check_branch
          %135 = sbr.rel (%p133) target = $region28
        $region27: #{tpu_custom_call.1} parent=23 // pred_region
          %136 = dma.done %s129, 128
        $region28: #{tpu_custom_call.1} parent=23 // pred_fallthru
          _
        %s137 = sand.u32 %s40, 1
        %s138 = scalar_lea.sflag [#allocation3], %s137
        %s139 = sand.u32 %s40, 1
        %s140 = smul.addr %s139, 8
        %s141 = scalar_lea.vmem [#allocation2], %s140
        %p142 = pneg %p53
        %p143 = pneg %p50
        %p144 = pneg %p81
        %p145 = pneg %p78
        %s146 = sand.u32 %s68, 1
        %s147 = scalar_lea.sflag [#allocation4], %s146
        %s148 = sand.u32 %s68, 1
        %s149 = smul.addr %s148, 8
        %s150 = scalar_lea.vmem [#allocation5], %s149
        %s151 = smul.u32 2, %s23
        %s152 = smul.u32 2, %s23
        %v153 = vld [vmem:[%s132] sm:$0xff]
        %v156 = vunpack.c.l.s4 1983009808
        %v157 = vunpack.c.0.s8 %v156
        %v158 = vlaneseq
        %v159 = vshrl.u32 %v158, 7
        %v160 = vsub.s32 %v157, %v159
        %v161 = vrot.slane %v153, %v160
        %v162 = vcombine.high %v161, %v161
        %v165 = vcombine.low %v161, %v162
        %v167 = vunpack.c.l.s4 1934713408
        %v168 = vunpack.c.0.s8 %v167
        %v169 = vlaneseq
        %v170 = vshrl.u32 %v169, 7
        %v171 = vsub.s32 %v168, %v170
        %v172 = vrot.slane %v165, %v171
        %v173 = vcombine.high %v172, 0.0
        %v176 = vcombine.low %v172, %v173
        %v178 = vunpack.c.l.s4 1983009808
        %v179 = vunpack.c.0.s8 %v178
        %v180 = vlaneseq
        %v181 = vshrl.u32 %v180, 7
        %v182 = vsub.s32 %v179, %v181
        %v183 = vrot.slane %v176, %v182
        %185 = vst [vmem:[%s150] sm:$0xff] %v183
        %s186 = sand.u32 %s68, 1
        %s187 = scalar_lea.sflag [#allocation4], %s186
        %s188 = sand.u32 %s68, 1
        %s189 = smul.addr %s188, 8
        %s190 = scalar_lea.vmem [#allocation5], %s189
        // Predicated region
        $region29: #{tpu_custom_call.1} parent=23 // pred_check
          %p191 = pneg %p78
        $region30: #{tpu_custom_call.1} parent=23 // pred_check_branch
          %193 = sbr.rel (%p191) target = $region32
        $region31: #{tpu_custom_call.1} parent=23 // pred_region
          %s194 = smul.u32 2, %s23
          %s196 = ssub.s32 128, 128
          %197 = vsyncadd %s187, %s196
          %s198 = smul.addr %s22, 2
          %s199 = sadd.s32 %s194, %s198
          %s200 = smul.addr %s199, 64
          %s201 = scalar_lea.hbm %s1, %s200
          %s203 = sshll.u32 %s190, 4
          %s204 = int_to_ptr.vmem [resolvable:$true] %s203
          %206 = dma.vmem_to_hbm [thread:$0]  %s204, 128, %s201, %s187
        $region32: #{tpu_custom_call.1} parent=23 // pred_fallthru
          _
      $region24: #{tpu_custom_call.1} parent=5 // pred_fallthru
        _
      %p207 = scmp.le.s32.totalorder 2, %s13
      // Predicated region
      $region33: #{tpu_custom_call.1} parent=5 // pred_check
        %p208 = pneg %p207
      $region34: #{tpu_custom_call.1} parent=5 // pred_check_branch
        %210 = sbr.rel (%p208) target = $region36
      $region35: #{tpu_custom_call.1} parent=5 // pred_region
        %s211 = ssub.s32 %s13, 2
        // Predicated region
        $region37: #{tpu_custom_call.1} parent=35 // pred_check
          %p212 = pneg %p84
        $region38: #{tpu_custom_call.1} parent=35 // pred_check_branch
          %214 = sbr.rel (%p212) target = $region40
        $region39: #{tpu_custom_call.1} parent=35 // pred_region
          %s215 = sand.u32 %s69, 1
          %s216 = scalar_lea.sflag [#allocation4], %s215
          %s217 = sand.u32 %s69, 1
          %s218 = smul.addr %s217, 8
          %s219 = scalar_lea.vmem [#allocation5], %s218
          %220 = dma.done %s216, 128
        $region40: #{tpu_custom_call.1} parent=35 // pred_fallthru
          _
      $region36: #{tpu_custom_call.1} parent=5 // pred_fallthru
        _
    $region6: #{tpu_custom_call.1} parent=1 // loop_footer
      %s17 = sadd.s32 1, %s13
    $region7: #{tpu_custom_call.1} parent=1 // loop_footer_branch
      %12 = sbr.rel target = $region3
    $region8: #{tpu_custom_call.1} parent=1 // loop_exit
      _
    %221 = vsyncpa [#allocation3], 1
    %s222 = scalar_lea.sflag [#allocation3], 1
    %223 = vsyncpa %s222, 1
    %224 = vsyncpa [#allocation4], 1
    %s225 = scalar_lea.sflag [#allocation4], 1
    %226 = vsyncpa %s225, 1

</llo_original>
